<compile_context>
chip_gen: v5e
topology: v5e:2x2
jax: 0.10.0
libtpu: 0.0.40
codegen_flags: <defaults>
</compile_context>

<pallas_src>
import jax
import jax.numpy as jnp
from jax import lax
from jax.experimental import pallas as pl
from jax.experimental.pallas import tpu as pltpu


def resnet_block_kernel(patch_ref, w_ref, o_ref):
    """One lane tile per (parallel) grid step.

    patch_ref: (KKC+1, lane_tile)  im2col patches + constant-1 bias row
    w_ref:     (Cout, KKC+1)       conv2 weight with residual + bias folded in
    o_ref:     (Cout, lane_tile)   lane-dense output tile
    """
    acc = jnp.dot(w_ref[...], patch_ref[...], preferred_element_type=jnp.float32)
    o_ref[...] = jnp.maximum(acc, 0.0).astype(o_ref.dtype)


def _choose_lane_tile(total_lanes: int) -> int:
    """Lane-tile width: multiple of 128, capped at 2048, and aiming for >= 2
    grid steps so both v7x TensorCores get work once the slab is wide enough."""
    padded = ((total_lanes + 127) // 128) * 128
    if padded <= 256:
        return padded
    half = (padded // 2) // 128 * 128
    return max(128, min(2048, half))


def resnet_block_forward(x_nchw, w2_oihw, b2, wup_oihw, *, stride=1,
                         compute_dtype=jnp.bfloat16):
    """Pallas implementation of ResNetBlock.forward (conv1 result is unused)."""
    N, Cin, H, W = x_nchw.shape
    Cout, Cin_w, K, _ = w2_oihw.shape
    assert Cin_w == Cin
    assert K % 2 == 1, "padding=(K-1)//2 is PyTorch-SAME only for odd kernels"
    pad = (K - 1) // 2
    H_out = (H + 2 * pad - K) // stride + 1
    W_out = (W + 2 * pad - K) // stride + 1
    HW = H_out * W_out
    KKC = K * K * Cin

    has_upscale = wup_oihw is not None
    if not has_upscale:
        # Module guarantees this (upscale exists iff Cin != Cout or stride != 1).
        assert Cin == Cout and stride == 1, \
            "identity residual requires in_channels == out_channels, stride == 1"

    # ---- im2col in the wrapper (layout plumbing; (dy, dx, c) tap ordering).
    # TODO(synk): at large H*W / Cin this amplifies HBM traffic ~K*K; switch to
    # an in-kernel K-tap scheme (DMA the padded input once per step) at scale.
    xpad = jnp.pad(x_nchw, ((0, 0), (0, 0), (pad, pad), (pad, pad)))
    taps = []
    for dy in range(K):
        for dx in range(K):
            taps.append(lax.slice(
                xpad, (0, 0, dy, dx),
                (N, Cin,
                 dy + stride * (H_out - 1) + 1,
                 dx + stride * (W_out - 1) + 1),
                (1, 1, stride, stride)))               # (N, Cin, H_out, W_out)
    # (K*K, N, Cin, Ho, Wo) -> (K*K, Cin, N, Ho, Wo) -> (KKC, N*HW): batch is
    # fused into the lane axis so fewer, wider grid steps amortize overhead.
    patches = jnp.stack(taps, axis=0).transpose(0, 2, 1, 3, 4).reshape(KKC, N * HW)
    # Constant-1 row folds the bias into the same contraction.
    patches = jnp.concatenate(
        [patches, jnp.ones((1, N * HW), patches.dtype)], axis=0)     # (KKC+1, N*HW)

    # ---- fold residual + bias into the conv2 weight (trace-time only).
    # (Cout, Cin, K, K) -> (Cout, K, K, Cin) -> (Cout, KKC): matches tap order.
    w2f = jnp.transpose(w2_oihw, (0, 2, 3, 1)).reshape(Cout, KKC)
    center_off = (pad * K + pad) * Cin                 # center im2col tap
    if has_upscale:
        res_w = wup_oihw[:, :, 0, 0]                   # (Cout, Cin) strided 1x1
    else:
        res_w = jnp.eye(Cout, dtype=w2f.dtype)         # identity residual
    w2f = w2f.at[:, center_off:center_off + Cin].add(res_w)
    w_full = jnp.concatenate([w2f, b2.reshape(Cout, 1)], axis=1)     # (Cout, KKC+1)
    KKC1 = KKC + 1

    # ---- lane tiling: pad N*HW up to a multiple of the tile width.
    total = N * HW
    lane_tile = _choose_lane_tile(total)
    padded_total = pl.cdiv(total, lane_tile) * lane_tile
    if padded_total != total:
        patches = jnp.pad(patches, ((0, 0), (0, padded_total - total)))
    num_tiles = padded_total // lane_tile

    patches = patches.astype(compute_dtype)            # bf16 operands to the MXU
    w_full = w_full.astype(compute_dtype)
    out_dtype = x_nchw.dtype

    # VMEM budget for the double-buffered blocks, with headroom; capped below
    # v7x's 64 MiB physical VMEM.
    isz = jnp.dtype(compute_dtype).itemsize
    osz = jnp.dtype(out_dtype).itemsize
    vmem_bytes = (2 * KKC1 * lane_tile * isz + 2 * Cout * lane_tile * osz
                  + 2 * Cout * KKC1 * isz + (2 << 20))
    vmem_limit = int(min(max(vmem_bytes, 16 << 20), 64 << 20))

    out = pl.pallas_call(
        resnet_block_kernel,
        out_shape=jax.ShapeDtypeStruct((Cout, padded_total), out_dtype),
        grid_spec=pltpu.PrefetchScalarGridSpec(
            num_scalar_prefetch=0,
            grid=(num_tiles,),
            in_specs=[
                pl.BlockSpec((KKC1, lane_tile), lambda i: (0, i)),
                pl.BlockSpec((Cout, KKC1), lambda i: (0, 0)),   # resident weight
            ],
            out_specs=pl.BlockSpec((Cout, lane_tile), lambda i: (0, i)),
        ),
        compiler_params=pltpu.CompilerParams(
            dimension_semantics=("parallel",),
            vmem_limit_bytes=vmem_limit),
    )(patches, w_full)

    # (Cout, N*HW) -> NCHW (pure layout plumbing in the wrapper).
    out = out[:, :total].reshape(Cout, N, H_out, W_out).transpose(1, 0, 2, 3)
    return out


def reference_forward(x, w2, b2, wup, *, stride=1):
    """Pure-JAX reference matching the PyTorch forward (conv1 output unused)."""
    K = w2.shape[-1]
    pad = (K - 1) // 2
    dn = ('NCHW', 'OIHW', 'NCHW')
    out = lax.conv_general_dilated(x, w2, (stride, stride),
                                   [(pad, pad), (pad, pad)],
                                   dimension_numbers=dn)
    out = out + b2.reshape(1, -1, 1, 1)
    if wup is not None:
        res = lax.conv_general_dilated(x, wup, (stride, stride),
                                       [(0, 0), (0, 0)], dimension_numbers=dn)
    else:
        res = x
    return jnp.maximum(out + res, 0.0)


if __name__ == "__main__":
    key = jax.random.PRNGKey(0)

    # --- Case 1: in=4 -> out=8, k=3, stride=1 -> 1x1 upscale (no bias) present.
    N, Cin, Cout, H, W, K, stride = 2, 4, 8, 16, 16, 3, 1
    k_x, k_w1, k_b1, k_w2, k_b2, k_up, key = jax.random.split(key, 7)

    x = jax.random.normal(k_x, (N, Cin, H, W), jnp.float32)
    # conv1 parameters exist in the module but its output is discarded in
    # forward, so they are created only for fidelity and never used.
    _w1 = 0.1 * jax.random.normal(k_w1, (Cout, Cin, K, K), jnp.float32)
    _b1 = 0.1 * jax.random.normal(k_b1, (Cout,), jnp.float32)
    w2 = 0.1 * jax.random.normal(k_w2, (Cout, Cin, K, K), jnp.float32)
    b2 = 0.1 * jax.random.normal(k_b2, (Cout,), jnp.float32)
    wup = 0.1 * jax.random.normal(k_up, (Cout, Cin, 1, 1), jnp.float32)

    ref = jax.block_until_ready(reference_forward(x, w2, b2, wup, stride=stride))

    # Exact-parity check with f32 operands.
    out_f32 = jax.block_until_ready(
        resnet_block_forward(x, w2, b2, wup, stride=stride,
                             compute_dtype=jnp.float32))
    assert out_f32.shape == (N, Cout, H, W), out_f32.shape
    assert jnp.allclose(out_f32, ref, atol=1e-4, rtol=1e-4), \
        float(jnp.max(jnp.abs(out_f32 - ref)))

    # Perf path: bf16 operands (f32 accumulate + ReLU); bf16-level tolerance.
    out_bf16 = jax.block_until_ready(
        resnet_block_forward(x, w2, b2, wup, stride=stride,
                             compute_dtype=jnp.bfloat16))
    assert out_bf16.shape == (N, Cout, H, W), out_bf16.shape
    assert jnp.allclose(out_bf16, ref, atol=5e-2, rtol=5e-2), \
        float(jnp.max(jnp.abs(out_bf16 - ref)))

    # --- Case 2: in == out == 4, stride=1 -> identity residual (no upscale).
    C2 = 4
    k_x2, k_w2b, k_b2b, key = jax.random.split(key, 4)
    x2 = jax.random.normal(k_x2, (N, C2, H, W), jnp.float32)
    w2b = 0.1 * jax.random.normal(k_w2b, (C2, C2, K, K), jnp.float32)
    b2b = 0.1 * jax.random.normal(k_b2b, (C2,), jnp.float32)

    ref2 = jax.block_until_ready(reference_forward(x2, w2b, b2b, None, stride=1))

    out2_f32 = jax.block_until_ready(
        resnet_block_forward(x2, w2b, b2b, None, stride=1,
                             compute_dtype=jnp.float32))
    assert out2_f32.shape == (N, C2, H, W), out2_f32.shape
    assert jnp.allclose(out2_f32, ref2, atol=1e-4, rtol=1e-4), \
        float(jnp.max(jnp.abs(out2_f32 - ref2)))

    out2_bf16 = jax.block_until_ready(
        resnet_block_forward(x2, w2b, b2b, None, stride=1,
                             compute_dtype=jnp.bfloat16))
    assert out2_bf16.shape == (N, C2, H, W), out2_bf16.shape
    assert jnp.allclose(out2_bf16, ref2, atol=5e-2, rtol=5e-2), \
        float(jnp.max(jnp.abs(out2_bf16 - ref2)))

    print("KERNEL_OK")
</pallas_src>

<mosaic_0001>
module attributes {stable_mosaic.version = 11 : i64} {
  func.func @resnet_block_kernel(%arg0: i32, %arg1: memref<37x256xf32, #tpu.memory_space<vmem>>, %arg2: memref<8x37xf32, #tpu.memory_space<vmem>>, %arg3: memref<8x256xf32, #tpu.memory_space<vmem>>) attributes {dimension_semantics = [#tpu.dimension_semantics<parallel>], iteration_bounds = array<i64: 2>, scalar_prefetch = 0 : i64, scratch_operands = 0 : i64, tpu.core_type = #tpu.core_type<tc>, window_params = [{transform_indices = @transform_0, window_bounds = array<i64: 37, 256>}, {pipeline_mode = #tpu.pipeline_mode<synchronous>, transform_indices = @transform_1, window_bounds = array<i64: 8, 37>}, {transform_indices = @transform_2, window_bounds = array<i64: 8, 256>}]} {
    %c0 = arith.constant 0 : index
    %c0_0 = arith.constant 0 : index
    %0 = vector.load %arg2[%c0, %c0_0] : memref<8x37xf32, #tpu.memory_space<vmem>>, vector<8x37xf32>
    %c0_1 = arith.constant 0 : index
    %c0_2 = arith.constant 0 : index
    %1 = vector.load %arg1[%c0_1, %c0_2] : memref<37x256xf32, #tpu.memory_space<vmem>>, vector<37x256xf32>
    %cst = arith.constant dense<0.000000e+00> : vector<8x256xf32>
    %2 = tpu.matmul %0, %1, %cst {dimension_numbers = #tpu.dot_dimension_numbers<[1], [0], [0], [1], [0, 0, 1, 1], [], []>} : vector<8x37xf32>, vector<37x256xf32>, vector<8x256xf32> -> vector<8x256xf32>
    %cst_3 = arith.constant 0.000000e+00 : f32
    %3 = vector.broadcast %cst_3 : f32 to vector<8x256xf32>
    %4 = arith.maximumf %2, %3 : vector<8x256xf32>
    %c0_4 = arith.constant 0 : index
    %c0_5 = arith.constant 0 : index
    %5 = vector.load %arg3[%c0_4, %c0_5] : memref<8x256xf32, #tpu.memory_space<vmem>>, vector<8x256xf32>
    tpu.vector_store %arg3[%c0_4, %c0_5], %4 {strides = array<i32>} : memref<8x256xf32, #tpu.memory_space<vmem>>, vector<8x256xf32>,
    return
  }
  func.func @transform_0(%arg0: i32) -> (i32, i32) {
    %c0_i32 = arith.constant 0 : i32
    %c0_i32_0 = arith.constant 0 : i32
    return %c0_i32, %arg0 : i32, i32
  }
  func.func @transform_1(%arg0: i32) -> (i32, i32) {
    %c0_i32 = arith.constant 0 : i32
    %c0_i32_0 = arith.constant 0 : i32
    %c0_i32_1 = arith.constant 0 : i32
    return %c0_i32, %c0_i32_0 : i32, i32
  }
  func.func @transform_2(%arg0: i32) -> (i32, i32) {
    %c0_i32 = arith.constant 0 : i32
    %c0_i32_0 = arith.constant 0 : i32
    return %c0_i32, %arg0 : i32, i32
  }
}

</mosaic_0001>

<llo_original>
// kernel: tpu_custom_call.1
$region0: #{tpu_custom_call.1}
  #allocation0 [shape = 'u32[]', space=smem, size = 0x4, offset = 0x4, fixed_abs, tag = 'smem constant byte address 0x4 - core index']
  #allocation1 [shape = 'u32[72,128]{1,0:T(1,128)}', space=vmem, size = 0x9000, scoped, tag = 'internal scratch']
  %s0 = inlined_call_operand.hbm [shape: f32[37,512], index: 0, kind: input, shape index: {}]
  %s1 = inlined_call_operand.hbm [shape: f32[8,37], index: 1, kind: input, shape index: {}]
  %s2 = inlined_call_operand.hbm [shape: f32[8,512], index: 2, kind: output, shape index: {}]
  %s3 = sld [smem:[#allocation0]]
  $region49: #{tpu_custom_call.1} parent=0
    _
  %s5 = ssub.s32 1, %s3
  %s6 = scalar_select 0, %s5, %s3
  $region1: #{tpu_custom_call.1} parent=0
    #allocation2 [shape = 'u8[81920]{0}', space=vmem, size = 0x14000, scoped, tag = 'input window, operand 0']
    #allocation3 [shape = 's32[2]{0}', space=sflag, size = 0x8, scoped, tag = 'scoped memory for tpu_custom_call.1']
    #allocation4 [shape = 's32[2]{0}', space=sflag, size = 0x8, scoped, tag = 'scoped memory for tpu_custom_call.1']
    #allocation5 [shape = 'u8[4096]{0}', space=vmem, size = 0x1000, scoped, tag = 'input window, operand 1, single buffered']
    #allocation6 [shape = 's32[1]{0}', space=sflag, size = 0x4, scoped, tag = 'scoped memory for tpu_custom_call.1']
    #allocation7 [shape = 'u8[16384]{0}', space=vmem, size = 0x4000, scoped, tag = 'output window, operand 0']
    %7 = vsyncpa [#allocation3], 0
    %s8 = scalar_lea.sflag [#allocation3], 1
    %9 = vsyncpa %s8, 0
    %10 = vsyncpa [#allocation6], 0
    %11 = vsyncpa [#allocation4], 0
    %s12 = scalar_lea.sflag [#allocation4], 1
    %13 = vsyncpa %s12, 0
    loop: start=0, step=1, limit=4
    $region2: #{tpu_custom_call.1} parent=1 // loop_pre_header
      _
    $region3: #{tpu_custom_call.1} parent=1 // loop_header
      %s15 = sphi 0, %s19
      %p16 = scmp.ge.s32.totalorder %s15, 4
      %s25 = sphi 0, %s27
      %s28 = sphi 0, %s25
      %s29 = sphi 0, %s28
      %s45 = sphi 0, %s29
      %s49 = sphi 0, %s49
      %s51 = sphi 0, %s49
      %s52 = sphi 0, %s51
      %s66 = sphi 0, %s52
      %s72 = sphi 0, %s74
      %s75 = sphi 0, %s72
      %s76 = sphi 0, %s75
      %s92 = sphi 0, %s76
    $region4: #{tpu_custom_call.1} parent=1 // loop_header_branch
      %18 = sbr.rel (%p16) target = $region8
    $region5: #{tpu_custom_call.1} parent=1 // loop_body
      %s20 = ssub.s32 %s15, 1
      %s21 = ssub.s32 %s15, 2
      %s22 = sadd.s32 %s15, 1
      %s23 = ssub.s32 %s15, %s22
      %p24 = scmp.eq.s32.totalorder %s23, 0
      %s26 = sadd.s32 %s25, 1
      %s27 = scalar_select %p24, %s25, %s26
      %p30 = pneg %p24
      %p31 = scmp.eq.s32.totalorder %s15, 1
      %p32 = por %p30, %p31
      %p33 = scmp.ne.s32.totalorder %s25, %s28
      %p34 = scmp.eq.s32.totalorder %s15, 0
      %p35 = por %p33, %p34
      %p36 = scmp.ne.s32.totalorder %s25, %s28
      %p37 = scmp.eq.s32.totalorder %s20, 1
      %p38 = por %p36, %p37
      %p39 = scmp.ne.s32.totalorder %s28, %s29
      %p40 = scmp.eq.s32.totalorder %s20, 0
      %p41 = por %p39, %p40
      %p42 = scmp.ne.s32.totalorder %s28, %s29
      %p43 = scmp.eq.s32.totalorder %s21, 1
      %p44 = por %p42, %p43
      %p46 = scmp.ne.s32.totalorder %s29, %s45
      %p47 = scmp.eq.s32.totalorder %s21, 0
      %p48 = por %p46, %p47
      %s50 = sadd.s32 %s49, 1
      %p53 = scmp.eq.s32.totalorder %s15, 1
      %p54 = scmp.ne.s32.totalorder %s49, %s51
      %p55 = scmp.eq.s32.totalorder %s15, 0
      %p56 = por %p54, %p55
      %p57 = scmp.ne.s32.totalorder %s49, %s51
      %p58 = scmp.eq.s32.totalorder %s20, 1
      %p59 = por %p57, %p58
      %p60 = scmp.ne.s32.totalorder %s51, %s52
      %p61 = scmp.eq.s32.totalorder %s20, 0
      %p62 = por %p60, %p61
      %p63 = scmp.ne.s32.totalorder %s51, %s52
      %p64 = scmp.eq.s32.totalorder %s21, 1
      %p65 = por %p63, %p64
      %p67 = scmp.ne.s32.totalorder %s52, %s66
      %p68 = scmp.eq.s32.totalorder %s21, 0
      %p69 = por %p67, %p68
      %s70 = ssub.s32 %s15, %s22
      %p71 = scmp.eq.s32.totalorder %s70, 0
      %s73 = sadd.s32 %s72, 1
      %s74 = scalar_select %p71, %s72, %s73
      %p77 = pneg %p71
      %p78 = scmp.eq.s32.totalorder %s15, 1
      %p79 = por %p77, %p78
      %p80 = scmp.ne.s32.totalorder %s72, %s75
      %p81 = scmp.eq.s32.totalorder %s15, 0
      %p82 = por %p80, %p81
      %p83 = scmp.ne.s32.totalorder %s72, %s75
      %p84 = scmp.eq.s32.totalorder %s20, 1
      %p85 = por %p83, %p84
      %p86 = scmp.ne.s32.totalorder %s75, %s76
      %p87 = scmp.eq.s32.totalorder %s20, 0
      %p88 = por %p86, %p87
      %p89 = scmp.ne.s32.totalorder %s75, %s76
      %p90 = scmp.eq.s32.totalorder %s21, 1
      %p91 = por %p89, %p90
      %p93 = scmp.ne.s32.totalorder %s76, %s92
      %p94 = scmp.eq.s32.totalorder %s21, 0
      %p95 = por %p93, %p94
      %p96 = scmp.le.s32.totalorder 1, %s15
      %p97 = scmp.lt.s32.totalorder %s15, 3
      %p98 = pnand %p96, %p97
      %p99 = pneg %p98
      // Predicated region
      $region9: #{tpu_custom_call.1} parent=5 // pred_check
        _
      $region10: #{tpu_custom_call.1} parent=5 // pred_check_branch
        %101 = sbr.rel (%p98) target = $region12
      $region11: #{tpu_custom_call.1} parent=5 // pred_region
        %s102 = ssub.s32 %s15, 1
        // Predicated region
        $region13: #{tpu_custom_call.1} parent=11 // pred_check
          %p103 = pneg %p62
        $region14: #{tpu_custom_call.1} parent=11 // pred_check_branch
          %105 = sbr.rel (%p103) target = $region16
        $region15: #{tpu_custom_call.1} parent=11 // pred_region
          %107 = vsyncadd [#allocation6], 0
          %s109 = sshll.u32 %s1, 4
          %s110 = int_to_ptr.hbm [resolvable:$true] %s109
          %s111 = sshll.u32 [#allocation5], 4
          %s112 = int_to_ptr.vmem [resolvable:$true] %s111
          %114 = dma.hbm_to_vmem [thread:$0]  %s110, 128, %s112, [#allocation6]
        $region16: #{tpu_custom_call.1} parent=11 // pred_fallthru
          _
      $region12: #{tpu_custom_call.1} parent=5 // pred_fallthru
        _
      %p115 = scmp.lt.s32.totalorder %s15, 2
      // Predicated region
      $region17: #{tpu_custom_call.1} parent=5 // pred_check
        %p116 = pneg %p115
      $region18: #{tpu_custom_call.1} parent=5 // pred_check_branch
        %118 = sbr.rel (%p116) target = $region20
      $region19: #{tpu_custom_call.1} parent=5 // pred_region
        // Predicated region
        $region21: #{tpu_custom_call.1} parent=19 // pred_check
          %p119 = pneg %p35
        $region22: #{tpu_custom_call.1} parent=19 // pred_check_branch
          %121 = sbr.rel (%p119) target = $region24
        $region23: #{tpu_custom_call.1} parent=19 // pred_region
          %s122 = sand.u32 %s25, 1
          %s123 = scalar_lea.sflag [#allocation3], %s122
          %s124 = sand.u32 %s25, 1
          %s125 = smul.addr %s124, 80
          %s126 = scalar_lea.vmem [#allocation2], %s125
          %s127 = smul.u32 2, %s15
          %129 = vsyncadd %s123, 0
          %s130 = smul.addr %s127, 8
          %s131 = scalar_lea.hbm %s0, %s130
          %s132 = sshll.u32 %s131, 4
          %s133 = int_to_ptr.hbm [resolvable:$true] %s132
          %s134 = sshll.u32 %s126, 4
          %s135 = int_to_ptr.vmem [resolvable:$true] %s134
          %140 = dma.hbm_to_vmem [thread:$0]  %s133, 1280, %s135, %s123, 512, 256, 16
        $region24: #{tpu_custom_call.1} parent=19 // pred_fallthru
          _
      $region20: #{tpu_custom_call.1} parent=5 // pred_fallthru
        _
      %p141 = scmp.le.s32.totalorder 1, %s15
      %p142 = scmp.lt.s32.totalorder %s15, 3
      %p143 = pnand %p141, %p142
      %p144 = pneg %p143
      // Predicated region
      $region25: #{tpu_custom_call.1} parent=5 // pred_check
        _
      $region26: #{tpu_custom_call.1} parent=5 // pred_check_branch
        %146 = sbr.rel (%p143) target = $region28
      $region27: #{tpu_custom_call.1} parent=5 // pred_region
        %s147 = ssub.s32 %s15, 1
        %s148 = sand.u32 %s28, 1
        %s149 = scalar_lea.sflag [#allocation3], %s148
        %s150 = sand.u32 %s28, 1
        %s151 = smul.addr %s150, 80
        %s152 = scalar_lea.vmem [#allocation2], %s151
        // Predicated region
        $region29: #{tpu_custom_call.1} parent=27 // pred_check
          %p153 = pneg %p41
        $region30: #{tpu_custom_call.1} parent=27 // pred_check_branch
          %155 = sbr.rel (%p153) target = $region32
        $region31: #{tpu_custom_call.1} parent=27 // pred_region
          %157 = dma.done %s149, 1280
        $region32: #{tpu_custom_call.1} parent=27 // pred_fallthru
          _
        // Predicated region
        $region33: #{tpu_custom_call.1} parent=27 // pred_check
          %p158 = pneg %p62
        $region34: #{tpu_custom_call.1} parent=27 // pred_check_branch
          %160 = sbr.rel (%p158) target = $region36
        $region35: #{tpu_custom_call.1} parent=27 // pred_region
          %162 = dma.done [#allocation6], 128
        $region36: #{tpu_custom_call.1} parent=27 // pred_fallthru
          _
        %s163 = sand.u32 %s28, 1
        %s164 = scalar_lea.sflag [#allocation3], %s163
        %s165 = sand.u32 %s28, 1
        %s166 = smul.addr %s165, 80
        %s167 = scalar_lea.vmem [#allocation2], %s166
        %p168 = pneg %p41
        %p169 = pneg %p38
        %p170 = pneg %p62
        %p171 = pneg %p59
        %p172 = pneg %p88
        %p173 = pneg %p85
        %s174 = sand.u32 %s75, 1
        %s175 = scalar_lea.sflag [#allocation4], %s174
        %s176 = sand.u32 %s75, 1
        %s177 = smul.addr %s176, 16
        %s178 = scalar_lea.vmem [#allocation7], %s177
        %s179 = smul.u32 2, %s20
        %s180 = smul.u32 2, %s20
        %v181 = vld [vmem:[#allocation5] sm:$0xff]
        %v182 = vld [vmem:[%s152] sm:$0xff]
        %v183 = vld [vmem:[%s152 + $0x8] sm:$0xff]
        %v184 = vld [vmem:[%s152 + $0x10] sm:$0xff]
        %v185 = vld [vmem:[%s152 + $0x18] sm:$0xff]
        %v186 = vld [vmem:[%s152 + $0x20] sm:$0xff]
        %v187 = vld [vmem:[%s152 + $0x28] sm:$0xff]
        %v188 = vld [vmem:[%s152 + $0x30] sm:$0xff]
        %v189 = vld [vmem:[%s152 + $0x38] sm:$0xff]
        %v190 = vld [vmem:[%s152 + $0x40] sm:$0x1f]
        %v191 = vld [vmem:[%s152 + $0x48] sm:$0x1f]
        %vm192 = vcmask 302080
        %v194 = vsel %vm192, %v181, 0
        %vm196 = vcmask 1044480
        %v198 = vsel %vm196, %v190, 0
        %v201 = vsel %vm196, %v191, 0
        %203 = vmatpush.msra.mxu0 0.0
        %204 = vmatpush.msra.mxu0 0.0
        %205 = vmatpush.msra.mxu0 0.0
        %206 = vmatpush.msra.mxu0 0.0
        %207 = vmatpush.msra.mxu0 0.0
        %208 = vmatpush.msra.mxu0 0.0
        %209 = vmatpush.msra.mxu0 0.0
        %210 = vmatpush.msra.mxu0 0.0
        %211 = vmatpush.msra.mxu0 0.0
        %212 = vmatpush.msra.mxu0 0.0
        %213 = vmatpush.msra.mxu0 0.0
        %214 = vmatpush.msra.mxu0 %v198
        %215 = vmatpush.msra.mxu0 %v188
        %216 = vmatpush.msra.mxu0 %v186
        %217 = vmatpush.msra.mxu0 %v184
        %218 = vmatpush.msra.mxu0 %v182
        %219 = vmatmul.f32.gmra.mxu0 %v194
        %v220 = vpop.f32.mrf.mxu0
        %v221 = vadd.f32 0.0, %v220
        %222 = vdwg.mxu0
        %223 = vmatpush.msra.mxu0 0.0
        %224 = vmatpush.msra.mxu0 0.0
        %225 = vmatpush.msra.mxu0 0.0
        %226 = vmatpush.msra.mxu0 0.0
        %227 = vmatpush.msra.mxu0 0.0
        %228 = vmatpush.msra.mxu0 0.0
        %229 = vmatpush.msra.mxu0 0.0
        %230 = vmatpush.msra.mxu0 0.0
        %231 = vmatpush.msra.mxu0 0.0
        %232 = vmatpush.msra.mxu0 0.0
        %233 = vmatpush.msra.mxu0 0.0
        %234 = vmatpush.msra.mxu0 %v201
        %235 = vmatpush.msra.mxu0 %v189
        %236 = vmatpush.msra.mxu0 %v187
        %237 = vmatpush.msra.mxu0 %v185
        %238 = vmatpush.msra.mxu0 %v183
        %239 = vmatmul.f32.gmra.mxu0 %v194
        %v240 = vpop.f32.mrf.mxu0
        %v241 = vadd.f32 0.0, %v240
        %242 = vdwg.mxu0
        %v243 = vmax.f32 %v221, 0.0
        %v244 = vmax.f32 %v241, 0.0
        %245 = vst [vmem:[%s178] sm:$0xff] %v243
        %246 = vst [vmem:[%s178 + $0x8] sm:$0xff] %v244
        %s247 = sand.u32 %s75, 1
        %s248 = scalar_lea.sflag [#allocation4], %s247
        %s249 = sand.u32 %s75, 1
        %s250 = smul.addr %s249, 16
        %s251 = scalar_lea.vmem [#allocation7], %s250
        // Predicated region
        $region37: #{tpu_custom_call.1} parent=27 // pred_check
          %p252 = pneg %p85
        $region38: #{tpu_custom_call.1} parent=27 // pred_check_branch
          %254 = sbr.rel (%p252) target = $region40
        $region39: #{tpu_custom_call.1} parent=27 // pred_region
          %s255 = smul.u32 2, %s20
          %257 = vsyncadd %s248, 0
          %s258 = smul.addr %s255, 8
          %s259 = scalar_lea.hbm %s2, %s258
          %s261 = sshll.u32 %s251, 4
          %s262 = int_to_ptr.vmem [resolvable:$true] %s261
          %s263 = sshll.u32 %s259, 4
          %s264 = int_to_ptr.hbm [resolvable:$true] %s263
          %266 = dma.vmem_to_hbm [thread:$0]  %s262, 256, %s264, %s248
        $region40: #{tpu_custom_call.1} parent=27 // pred_fallthru
          _
      $region28: #{tpu_custom_call.1} parent=5 // pred_fallthru
        _
      %p267 = scmp.le.s32.totalorder 2, %s15
      // Predicated region
      $region41: #{tpu_custom_call.1} parent=5 // pred_check
        %p268 = pneg %p267
      $region42: #{tpu_custom_call.1} parent=5 // pred_check_branch
        %270 = sbr.rel (%p268) target = $region44
      $region43: #{tpu_custom_call.1} parent=5 // pred_region
        %s271 = ssub.s32 %s15, 2
        // Predicated region
        $region45: #{tpu_custom_call.1} parent=43 // pred_check
          %p272 = pneg %p91
        $region46: #{tpu_custom_call.1} parent=43 // pred_check_branch
          %274 = sbr.rel (%p272) target = $region48
        $region47: #{tpu_custom_call.1} parent=43 // pred_region
          %s275 = sand.u32 %s76, 1
          %s276 = scalar_lea.sflag [#allocation4], %s275
          %s277 = sand.u32 %s76, 1
          %s278 = smul.addr %s277, 16
          %s279 = scalar_lea.vmem [#allocation7], %s278
          %281 = dma.done %s276, 256
        $region48: #{tpu_custom_call.1} parent=43 // pred_fallthru
          _
      $region44: #{tpu_custom_call.1} parent=5 // pred_fallthru
        _
    $region6: #{tpu_custom_call.1} parent=1 // loop_footer
      %s19 = sadd.s32 1, %s15
    $region7: #{tpu_custom_call.1} parent=1 // loop_footer_branch
      %14 = sbr.rel target = $region3
    $region8: #{tpu_custom_call.1} parent=1 // loop_exit
      _
    %282 = vsyncpa [#allocation3], 1
    %s283 = scalar_lea.sflag [#allocation3], 1
    %284 = vsyncpa %s283, 1
    %285 = vsyncpa [#allocation6], 1
    %286 = vsyncpa [#allocation4], 1
    %s287 = scalar_lea.sflag [#allocation4], 1
    %288 = vsyncpa %s287, 1

</llo_original>
